<compile_context>
chip_gen: v6e
topology: v6e:2x2x1
jax: 0.10.0
libtpu: 0.0.40
codegen_flags: <defaults>
</compile_context>

<pallas_src>
import functools

import jax
import jax.numpy as jnp
from jax import lax
from jax.experimental import pallas as pl
from jax.experimental.pallas import tpu as pltpu

_EPS = 1e-12  # matches torch.nn.functional.normalize default eps


def _simsiam_tile_kernel(z1_ref, z2_ref, out_ref, *, batch, tile_rows):
    """One grid step: partial sum of per-row cosine(z1_i, z2_i) over a row tile."""
    # [tb, D] tiles; upcast to f32 for the reductions (VPU, f32 accumulate).
    # NOTE: the VMEM budget in the wrapper assumes this upcast may materialize
    # f32 temps, so vreg/VMEM pressure stays bounded even if it isn't fused.
    z1 = z1_ref[...].astype(jnp.float32)
    z2 = z2_ref[...].astype(jnp.float32)

    s12 = jnp.sum(z1 * z2, axis=-1, keepdims=True)   # [tb, 1]
    s11 = jnp.sum(z1 * z1, axis=-1, keepdims=True)   # [tb, 1]
    s22 = jnp.sum(z2 * z2, axis=-1, keepdims=True)   # [tb, 1]

    # 1 / max(||x||, eps) == min(rsqrt(||x||^2), 1/eps).  rsqrt runs on the
    # EUP (its own VLIW slot) and removes the divide from the VPU path.
    inv1 = jnp.minimum(lax.rsqrt(s11), jnp.float32(1.0 / _EPS))
    inv2 = jnp.minimum(lax.rsqrt(s22), jnp.float32(1.0 / _EPS))
    cos = s12 * inv1 * inv2                            # [tb, 1]

    if batch % tile_rows != 0:
        # Tail tile only (trace-time-static branch, zero cost otherwise):
        # rows past `batch` hold garbage since we no longer pad in the
        # wrapper; mask them out of the partial sum.
        rows = lax.broadcasted_iota(jnp.int32, cos.shape, 0)
        valid = pl.program_id(0) * tile_rows + rows < batch
        cos = jnp.where(valid, cos, 0.0)

    # Lane-dense (1, 8, 128) slab: broadcast the tile's partial sum (unmasked
    # full-vreg store).  The wrapper reads element [i, 0, 0] per tile.
    out_ref[...] = jnp.broadcast_to(jnp.sum(cos), out_ref.shape)


def _cdiv(a, b):
    return (a + b - 1) // b


def _round_up(x, m):
    return ((x + m - 1) // m) * m


def _choose_tile_rows(batch, feat, itemsize):
    """Pick the row-tile size from a VMEM budget + dtype packing + megacore."""
    # Native sublane packing: 8 rows (4-byte), 16 (2-byte), 32 (1-byte).
    packing = max(8, 32 // itemsize)
    # ~12 MiB per grid step: 2 inputs x 2 pipeline buffers of [tb, D] in the
    # input dtype plus ~3 f32 [tb, D]-sized temps if the upcast materializes.
    # Fits v5e's 16 MiB scoped default; ample headroom on v6e (128 MiB) and
    # v7x (64 MiB physical / 32 MiB scoped default).
    budget_bytes = 12 * 1024 * 1024
    bytes_per_row = feat * (4 * itemsize + 3 * 4)
    tb = max(budget_bytes // bytes_per_row, packing)
    tb = (tb // packing) * packing
    tb = min(tb, 512)  # ~85% of HBM roofline at 512 rows; marginal gain beyond
    if batch <= tb:
        # Single tile covering the whole batch (block == full dim is legal).
        return batch
    # Keep >= 2 tiles so the "parallel" batch axis spans both v7x TensorCores.
    tb = min(tb, _round_up(_cdiv(batch, 2), packing))
    return max(tb, packing)


@functools.partial(jax.jit, static_argnames=("alpha", "beta", "tile_rows"))
def simsiam_loss(z1, z2, alpha: float = 0.5, beta: float = 0.5, tile_rows=None):
    assert z1.shape == z2.shape and z1.ndim == 2
    B, D = z1.shape
    itemsize = jnp.dtype(z1.dtype).itemsize

    tb = tile_rows if tile_rows is not None else _choose_tile_rows(B, D, itemsize)
    num_tiles = _cdiv(B, tb)

    cost = pl.CostEstimate(
        flops=6 * B * D + 10 * B,          # 3 row reductions + per-row epilogue
        transcendentals=2 * B,             # two rsqrt per row
        bytes_accessed=2 * B * D * itemsize + num_tiles * 8 * 128 * 4,
    )

    kernel = functools.partial(_simsiam_tile_kernel, batch=B, tile_rows=tb)

    partials = pl.pallas_call(
        kernel,
        out_shape=jax.ShapeDtypeStruct((num_tiles, 8, 128), jnp.float32),
        grid=(num_tiles,),
        in_specs=[
            pl.BlockSpec((tb, D), lambda i: (i, 0)),
            pl.BlockSpec((tb, D), lambda i: (i, 0)),
        ],
        out_specs=pl.BlockSpec((1, 8, 128), lambda i: (i, 0, 0)),
        compiler_params=pltpu.CompilerParams(
            dimension_semantics=("parallel",),
        ),
        cost_estimate=cost,
    )(z1, z2)

    # Tiny cross-tile reduction + alpha/beta scaling in the wrapper.
    mean_cos = jnp.sum(partials[:, 0, 0]) / jnp.float32(B)
    sim_1 = -mean_cos   # -(normalize(z1) * normalize(z2)).sum(-1).mean()
    sim_2 = -mean_cos   # identical value in the forward pass (detach is grad-only)
    return alpha * sim_1 + beta * sim_2


def simsiam_loss_ref(z1, z2, alpha=0.5, beta=0.5):
    # Pure-JAX reference mirroring the PyTorch module's forward pass.
    def normalize(x):
        x = x.astype(jnp.float32)
        n = jnp.linalg.norm(x, axis=-1, keepdims=True)
        return x / jnp.maximum(n, _EPS)

    sim_1 = -jnp.mean(jnp.sum(normalize(z1) * normalize(z2), axis=-1))
    sim_2 = -jnp.mean(jnp.sum(normalize(z2) * normalize(z1), axis=-1))
    return alpha * sim_1 + beta * sim_2


if __name__ == "__main__":
    key = jax.random.PRNGKey(0)
    k1, k2 = jax.random.split(key)

    # Small shapes consistent with the module (batch of embedding rows).
    B, D = 8, 32
    z1 = jax.random.normal(k1, (B, D), dtype=jnp.float32)
    z2 = jax.random.normal(k2, (B, D), dtype=jnp.float32)

    loss = jax.block_until_ready(simsiam_loss(z1, z2, alpha=0.5, beta=0.5))
    ref = jax.block_until_ready(simsiam_loss_ref(z1, z2, alpha=0.5, beta=0.5))
    assert jnp.allclose(loss, ref, rtol=1e-4, atol=1e-6), (loss, ref)

    # Exercise the in-kernel tail-mask path (batch not a multiple of the tile).
    B2 = 20
    z1b = jax.random.normal(jax.random.PRNGKey(1), (B2, D), dtype=jnp.float32)
    z2b = jax.random.normal(jax.random.PRNGKey(2), (B2, D), dtype=jnp.float32)
    loss2 = jax.block_until_ready(
        simsiam_loss(z1b, z2b, alpha=0.3, beta=0.7, tile_rows=8))
    ref2 = jax.block_until_ready(simsiam_loss_ref(z1b, z2b, alpha=0.3, beta=0.7))
    assert jnp.allclose(loss2, ref2, rtol=1e-4, atol=1e-6), (loss2, ref2)

    print("KERNEL_OK")
</pallas_src>

<mosaic_0001>
module attributes {stable_mosaic.version = 11 : i64} {
  func.func @_simsiam_tile_kernel(%arg0: i32, %arg1: memref<8x32xf32, #tpu.memory_space<vmem>>, %arg2: memref<8x32xf32, #tpu.memory_space<vmem>>, %arg3: memref<1x8x128xf32, #tpu.memory_space<vmem>>) attributes {dimension_semantics = [#tpu.dimension_semantics<parallel>], iteration_bounds = array<i64: 1>, scalar_prefetch = 0 : i64, scratch_operands = 0 : i64, tpu.core_type = #tpu.core_type<tc>, window_params = [{transform_indices = @transform_0, window_bounds = array<i64: 8, 32>}, {transform_indices = @transform_1, window_bounds = array<i64: 8, 32>}, {transform_indices = @transform_2, window_bounds = array<i64: 1, 8, 128>}]} {
    %c0 = arith.constant 0 : index
    %c0_0 = arith.constant 0 : index
    %0 = vector.load %arg1[%c0, %c0_0] : memref<8x32xf32, #tpu.memory_space<vmem>>, vector<8x32xf32>
    %c0_1 = arith.constant 0 : index
    %c0_2 = arith.constant 0 : index
    %1 = vector.load %arg2[%c0_1, %c0_2] : memref<8x32xf32, #tpu.memory_space<vmem>>, vector<8x32xf32>
    %2 = arith.mulf %0, %1 : vector<8x32xf32>
    %cst = arith.constant dense<0.000000e+00> : vector<8xf32>
    %3 = vector.multi_reduction <add>, %2, %cst [1] : vector<8x32xf32> to vector<8xf32>
    %4 = vector.shape_cast %3 : vector<8xf32> to vector<8x1xf32>
    %5 = arith.mulf %0, %0 : vector<8x32xf32>
    %cst_3 = arith.constant dense<0.000000e+00> : vector<8xf32>
    %6 = vector.multi_reduction <add>, %5, %cst_3 [1] : vector<8x32xf32> to vector<8xf32>
    %7 = vector.shape_cast %6 : vector<8xf32> to vector<8x1xf32>
    %8 = arith.mulf %1, %1 : vector<8x32xf32>
    %cst_4 = arith.constant dense<0.000000e+00> : vector<8xf32>
    %9 = vector.multi_reduction <add>, %8, %cst_4 [1] : vector<8x32xf32> to vector<8xf32>
    %10 = vector.shape_cast %9 : vector<8xf32> to vector<8x1xf32>
    %11 = math.rsqrt %7 : vector<8x1xf32>
    %cst_5 = arith.constant 9.99999995E+11 : f32
    %12 = vector.broadcast %cst_5 : f32 to vector<8x1xf32>
    %13 = arith.minimumf %11, %12 : vector<8x1xf32>
    %14 = math.rsqrt %10 : vector<8x1xf32>
    %cst_6 = arith.constant 9.99999995E+11 : f32
    %15 = vector.broadcast %cst_6 : f32 to vector<8x1xf32>
    %16 = arith.minimumf %14, %15 : vector<8x1xf32>
    %17 = arith.mulf %4, %13 : vector<8x1xf32>
    %18 = arith.mulf %17, %16 : vector<8x1xf32>
    %19 = vector.shape_cast %18 : vector<8x1xf32> to vector<1x8x1xf32>
    %cst_7 = arith.constant dense<0.000000e+00> : vector<1xf32>
    %20 = vector.multi_reduction <add>, %19, %cst_7 [1, 2] : vector<1x8x1xf32> to vector<1xf32>
    %21 = vector.shape_cast %20 : vector<1xf32> to vector<1x1x1xf32>
    %22 = vector.extract %21[0, 0, 0] : f32 from vector<1x1x1xf32>
    %23 = vector.broadcast %22 : f32 to vector<1x8x128xf32>
    %c0_8 = arith.constant 0 : index
    %c0_9 = arith.constant 0 : index
    %c0_10 = arith.constant 0 : index
    %24 = vector.load %arg3[%c0_8, %c0_9, %c0_10] : memref<1x8x128xf32, #tpu.memory_space<vmem>>, vector<1x8x128xf32>
    tpu.vector_store %arg3[%c0_8, %c0_9, %c0_10], %23 {strides = array<i32>} : memref<1x8x128xf32, #tpu.memory_space<vmem>>, vector<1x8x128xf32>,
    return
  }
  func.func @transform_0(%arg0: i32) -> (i32, i32) {
    %c0_i32 = arith.constant 0 : i32
    %c0_i32_0 = arith.constant 0 : i32
    return %arg0, %c0_i32 : i32, i32
  }
  func.func @transform_1(%arg0: i32) -> (i32, i32) {
    %c0_i32 = arith.constant 0 : i32
    %c0_i32_0 = arith.constant 0 : i32
    return %arg0, %c0_i32 : i32, i32
  }
  func.func @transform_2(%arg0: i32) -> (i32, i32, i32) {
    %c0_i32 = arith.constant 0 : i32
    %c0_i32_0 = arith.constant 0 : i32
    %c0_i32_1 = arith.constant 0 : i32
    return %arg0, %c0_i32, %c0_i32_0 : i32, i32, i32
  }
}

</mosaic_0001>

<llo_original>
// kernel: simsiam_loss.1
$region0: #{simsiam_loss.1}
  #allocation0 [shape = 'u32[]', space=smem, size = 0x4, offset = 0x4, fixed_abs, tag = 'smem constant byte address 0x4 - core index']
  #allocation1 [shape = 'u32[144,128]{1,0:T(1,128)}', space=vmem, size = 0x12000, scoped, tag = 'internal scratch']
  %s0 = inlined_call_operand.hbm [shape: f32[8,32], index: 0, kind: input, shape index: {}]
  %s1 = inlined_call_operand.hbm [shape: f32[8,32], index: 1, kind: input, shape index: {}]
  %s2 = inlined_call_operand.vmem [shape: f32[1,8,128], index: 2, kind: output, shape index: {}]
  %s3 = sld [smem:[#allocation0]]
  $region26: #{simsiam_loss.1} parent=0
    _
  %s5 = ssub.s32 1, %s3
  %s6 = scalar_select 0, %s5, %s3
  $region1: #{simsiam_loss.1} parent=0
    #allocation2 [shape = 'u8[4096]{0}', space=vmem, size = 0x1000, scoped, tag = 'input window, operand 0, single buffered']
    #allocation3 [shape = 's32[1]{0}', space=sflag, size = 0x4, scoped, tag = 'scoped memory for simsiam_loss.1']
    #allocation4 [shape = 'u8[4096]{0}', space=vmem, size = 0x1000, scoped, tag = 'input window, operand 1, single buffered']
    #allocation5 [shape = 's32[1]{0}', space=sflag, size = 0x4, scoped, tag = 'scoped memory for simsiam_loss.1']
    %7 = vsyncpa [#allocation3], 0
    %8 = vsyncpa [#allocation5], 0
    // Predicated region
    $region2: #{simsiam_loss.1} parent=1 // pred_check
      _
    $region3: #{simsiam_loss.1} parent=1 // pred_check_branch
      %10 = sbr.rel (0) target = $region5
    $region4: #{simsiam_loss.1} parent=1 // pred_region
      %s12 = ssub.s32 128, 128
      %13 = vsyncadd [#allocation3], %s12
      %s15 = sshll.u32 [#allocation2], 4
      %s16 = int_to_ptr.vmem [resolvable:$true] %s15
      %18 = dma.hbm_to_vmem [thread:$0]  %s0, 128, %s16, [#allocation3]
    $region5: #{simsiam_loss.1} parent=1 // pred_fallthru
      _
    // Predicated region
    $region6: #{simsiam_loss.1} parent=1 // pred_check
      _
    $region7: #{simsiam_loss.1} parent=1 // pred_check_branch
      %20 = sbr.rel (0) target = $region9
    $region8: #{simsiam_loss.1} parent=1 // pred_region
      %s22 = ssub.s32 128, 128
      %23 = vsyncadd [#allocation5], %s22
      %s25 = sshll.u32 [#allocation4], 4
      %s26 = int_to_ptr.vmem [resolvable:$true] %s25
      %28 = dma.hbm_to_vmem [thread:$0]  %s1, 128, %s26, [#allocation5]
    $region9: #{simsiam_loss.1} parent=1 // pred_fallthru
      _
    // Predicated region
    $region10: #{simsiam_loss.1} parent=1 // pred_check
      _
    $region11: #{simsiam_loss.1} parent=1 // pred_check_branch
      %30 = sbr.rel (0) target = $region13
    $region12: #{simsiam_loss.1} parent=1 // pred_region
      %31 = dma.done [#allocation3], 128
    $region13: #{simsiam_loss.1} parent=1 // pred_fallthru
      _
    // Predicated region
    $region14: #{simsiam_loss.1} parent=1 // pred_check
      _
    $region15: #{simsiam_loss.1} parent=1 // pred_check_branch
      %33 = sbr.rel (0) target = $region17
    $region16: #{simsiam_loss.1} parent=1 // pred_region
      %34 = dma.done [#allocation5], 128
    $region17: #{simsiam_loss.1} parent=1 // pred_fallthru
      _
    %v35 = vld [vmem:[#allocation2] sm:$0xff]
    %v36 = vld [vmem:[#allocation4] sm:$0xff]
    %v37 = vmul.f32 %v35, %v36
    %vm38 = vcmask 261120
    %v39 = vsel %vm38, %v37, 0.0
    %40 = vadd.xlane.f32.xlu0 %v39
    %v41 = vpop.xlane.xlu0 %40
    %v42 = vmul.f32 %v35, %v35
    %v43 = vsel %vm38, %v42, 0.0
    %44 = vadd.xlane.f32.xlu0 %v43
    %v45 = vpop.xlane.xlu0 %44
    %v46 = vmul.f32 %v36, %v36
    %v47 = vsel %vm38, %v46, 0.0
    %48 = vadd.xlane.f32.xlu0 %v47
    %v49 = vpop.xlane.xlu0 %48
    %v50 = vrsqrt.pop %v45
    %v51 = vmin.f32 %v50, 1e+12
    %v52 = vrsqrt.pop %v49
    %v53 = vmin.f32 %v52, 1e+12
    %v54 = vmul.f32 %v41, %v51
    %v55 = vmul.f32 %v54, %v53
    %vm56 = vcmask 7168
    %v57 = vsel %vm56, %v55, 0.0
    %58 = vadd.xlane.f32.xlu0 %v57
    %v59 = vpop.xlane.xlu0 %58
    %v60 = vrot.slane %v59, 4
    %v61 = vadd.f32 %v59, %v60
    %v62 = vrot.slane %v61, 2
    %v63 = vadd.f32 %v61, %v62
    %v64 = vrot.slane %v63, 1
    %v65 = vadd.f32 %v63, %v64
    %s66 = vtos %v65
    %v67 = vstv %s66
    %68 = vst [vmem:[%s2] sm:$0xff] %v67
    // Predicated region
    $region18: #{simsiam_loss.1} parent=1 // pred_check
      _
    $region19: #{simsiam_loss.1} parent=1 // pred_check_branch
      %70 = sbr.rel (0) target = $region21
    $region20: #{simsiam_loss.1} parent=1 // pred_region
      _
    $region21: #{simsiam_loss.1} parent=1 // pred_fallthru
      _
    // Predicated region
    $region22: #{simsiam_loss.1} parent=1 // pred_check
      _
    $region23: #{simsiam_loss.1} parent=1 // pred_check_branch
      %72 = sbr.rel (0) target = $region25
    $region24: #{simsiam_loss.1} parent=1 // pred_region
      _
    $region25: #{simsiam_loss.1} parent=1 // pred_fallthru
      _
    %73 = vsyncpa [#allocation3], 1
    %74 = vsyncpa [#allocation5], 1

</llo_original>
